<compile_context>
chip_gen: v6e
topology: v6e:2x2x1
jax: 0.10.0
libtpu: 0.0.40
codegen_flags: <defaults>
</compile_context>

<pallas_src>
import jax
import jax.numpy as jnp
from jax import lax
from jax.experimental import pallas as pl
from jax.experimental.pallas import tpu as pltpu


# Fully unroll the elimination (static slicing, best LLO interleave) up to this
# many samples; above it, use a fori_loop with a VMEM-resident working matrix.
_UNROLL_MAX = 128


def _ridge_kernel(lam_ref, x_ref, y_ref, theta_ref, *scratch):
    """lam_ref: (1,1) f32 SMEM; x_ref: (1,n,d); y_ref: (1,d,1); theta_ref: (1,1,n)."""
    X = x_ref[0]                      # (n, d)
    yv = y_ref[0]                     # (d, 1)
    n = X.shape[0]
    lam = lam_ref[0, 0]

    # --- A = X @ X.T + lam * I  (contract the feature axis of both operands) --
    G = lax.dot_general(
        X, X,
        dimension_numbers=(((1,), (1,)), ((), ())),
        preferred_element_type=jnp.float32,
    )                                                   # (n, n)
    ri = lax.broadcasted_iota(jnp.int32, (n, n), 0)
    ci = lax.broadcasted_iota(jnp.int32, (n, n), 1)
    A = jnp.where(ri == ci, G + lam, G)                 # G + lam*I (no eye temp)

    # --- RHS as a lane-dense ROW: b = (X @ y)^T  ->  (1, n) --------------------
    b = lax.dot_general(
        yv, X,
        dimension_numbers=(((0,), (1,)), ((), ())),
        preferred_element_type=jnp.float32,
    )                                                   # (1, n)

    lane = lax.broadcasted_iota(jnp.int32, (1, n), 1)   # (1, n) lane indices

    if n <= _UNROLL_MAX:
        # Fully-unrolled column-elimination Gauss-Jordan; every slice is static.
        M = A
        for k in range(n):
            pivot = M[k:k + 1, k:k + 1]                          # (1, 1)
            r = pl.reciprocal(pivot, approx=True)                # EUP (free slot)
            inv_p = r * (2.0 - pivot * r)                        # Newton -> f32
            col_s = M[:, k:k + 1] * inv_p                        # (n, 1)
            # Fold the pivot normalization into the single rank-1 update:
            #   factors[j] = M[k, j] (j != k),   factors[k] = pivot - 1
            factors = jnp.where(lane == k, pivot - 1.0, M[k:k + 1, :])  # (1, n)
            b_k = b[0:1, k:k + 1]                                # (1, 1)
            M = M - col_s * factors
            b = b - (b_k * inv_p) * factors
        theta = b                                                # (1, n)
    else:
        # VMEM-resident working matrix: never carry an (n, n) matrix through a
        # fori_loop as a value (it would spill the whole vreg file each step).
        m_ref = scratch[0]
        m_ref[...] = A
        col_iota = lax.broadcasted_iota(jnp.int32, (n, 1), 0)

        def body(k, bb):
            row_k = m_ref[pl.ds(k, 1), :]                        # (1, n) dyn sublane slice
            e_lane = (lane == k).astype(jnp.float32)             # (1, n)
            e_col = (col_iota == k).astype(jnp.float32)          # (n, 1)
            pivot = jnp.sum(row_k * e_lane, keepdims=True)       # (1, 1) XLU reduce
            r = pl.reciprocal(pivot, approx=True)
            inv_p = r * (2.0 - pivot * r)                        # Newton -> f32
            M = m_ref[...]                                       # (n, n)
            col_k = jnp.dot(M, e_col,
                            preferred_element_type=jnp.float32)  # (n, 1) one-hot MXU
            factors = row_k - e_lane                             # factors[k] = pivot - 1
            m_ref[...] = M - (col_k * inv_p) * factors
            b_k = jnp.sum(bb * e_lane, keepdims=True)            # (1, 1)
            return bb - (b_k * inv_p) * factors

        theta = lax.fori_loop(0, n, body, b)                     # (1, n)

    theta_ref[0, :, :] = theta


def _ridge_pallas_call(B, n, d):
    scratch = [] if n <= _UNROLL_MAX else [pltpu.VMEM((n, n), jnp.float32)]
    return pl.pallas_call(
        _ridge_kernel,
        out_shape=jax.ShapeDtypeStruct((B, 1, n), jnp.float32),
        grid=(B,),
        in_specs=[
            pl.BlockSpec(memory_space=pltpu.MemorySpace.SMEM),       # lambda (1,1)
            pl.BlockSpec((1, n, d), lambda b: (b, 0, 0)),            # X block
            pl.BlockSpec((1, d, 1), lambda b: (b, 0, 0)),            # y block
        ],
        out_specs=pl.BlockSpec((1, 1, n), lambda b: (b, 0, 0)),      # lane-dense row
        scratch_shapes=scratch,
        compiler_params=pltpu.CompilerParams(
            dimension_semantics=("parallel",)),
    )


def ridge_regression_hg_forward_batched(X, y, lambda_):
    """X: (B, n, d) f32, y: (B, d) f32, lambda_: scalar. Returns theta: (B, n)."""
    X = jnp.asarray(X, jnp.float32)
    y = jnp.asarray(y, jnp.float32)
    B, n, d = X.shape
    lam = jnp.asarray(lambda_, jnp.float32).reshape(1, 1)
    out = _ridge_pallas_call(B, n, d)(lam, X, y.reshape(B, d, 1))   # (B, 1, n)
    return out.reshape(B, n)


def ridge_regression_hg_forward(X, y, lambda_):
    """X: (n, d) f32, y: (d,) f32 -> theta: (n,) = inv(X X^T + lam I) @ (X y)."""
    X = jnp.asarray(X, jnp.float32)
    y = jnp.asarray(y, jnp.float32)
    return ridge_regression_hg_forward_batched(X[None], y[None], lambda_)[0]


def _reference(X, y, lam):
    hi = jax.lax.Precision.HIGHEST
    n = X.shape[0]
    A = jnp.dot(X, X.T, precision=hi) + lam * jnp.eye(n, dtype=jnp.float32)
    return jnp.dot(jnp.linalg.inv(A), jnp.dot(X, y, precision=hi), precision=hi)


if __name__ == "__main__":
    lambda_ = 0.1
    key = jax.random.PRNGKey(0)
    k1, k2, k3, k4 = jax.random.split(key, 4)

    # 1) Single problem, unrolled path (matches the torch forward exactly).
    n, d = 8, 16
    X = jax.random.normal(k1, (n, d), dtype=jnp.float32)
    y = jax.random.normal(k2, (d,), dtype=jnp.float32)
    theta = jax.block_until_ready(ridge_regression_hg_forward(X, y, lambda_))
    ref = _reference(X, y, lambda_)
    assert theta.shape == (n,)
    assert jnp.allclose(theta, ref, rtol=5e-4, atol=5e-4), (theta, ref)

    # 2) Batched path: one pallas_call, parallel grid over B problems.
    B = 2
    Xb = jax.random.normal(k3, (B, n, d), dtype=jnp.float32)
    yb = jax.random.normal(k4, (B, d), dtype=jnp.float32)
    thetab = jax.block_until_ready(
        ridge_regression_hg_forward_batched(Xb, yb, lambda_))
    assert thetab.shape == (B, n)
    for i in range(B):
        refb = _reference(Xb[i], yb[i], lambda_)
        assert jnp.allclose(thetab[i], refb, rtol=5e-4, atol=5e-4), (i, thetab[i], refb)

    # 3) n > _UNROLL_MAX: exercises the fori_loop / VMEM-scratch path.
    n2, d2, lam2 = 160, 192, 5.0
    X2 = jax.random.normal(k1, (n2, d2), dtype=jnp.float32)
    y2 = jax.random.normal(k2, (d2,), dtype=jnp.float32)
    theta2 = jax.block_until_ready(ridge_regression_hg_forward(X2, y2, lam2))
    ref2 = _reference(X2, y2, lam2)
    assert theta2.shape == (n2,)
    assert jnp.allclose(theta2, ref2, rtol=5e-3, atol=5e-3), (
        float(jnp.max(jnp.abs(theta2 - ref2))))

    print("KERNEL_OK")
</pallas_src>

<mosaic_0001>
module attributes {stable_mosaic.version = 11 : i64} {
  func.func @_ridge_kernel(%arg0: i32, %arg1: memref<1x1xf32, #tpu.memory_space<smem>>, %arg2: memref<1x8x16xf32, #tpu.memory_space<vmem>>, %arg3: memref<1x16x1xf32, #tpu.memory_space<vmem>>, %arg4: memref<1x1x8xf32, #tpu.memory_space<vmem>>) attributes {dimension_semantics = [#tpu.dimension_semantics<parallel>], iteration_bounds = array<i64: 1>, scalar_prefetch = 0 : i64, scratch_operands = 0 : i64, tpu.core_type = #tpu.core_type<tc>, window_params = [{transform_indices = @transform_0, window_bounds = array<i64: 1, 1>}, {transform_indices = @transform_1, window_bounds = array<i64: 1, 8, 16>}, {transform_indices = @transform_2, window_bounds = array<i64: 1, 16, 1>}, {transform_indices = @transform_3, window_bounds = array<i64: 1, 1, 8>}]} {
    %c0 = arith.constant 0 : index
    %c0_0 = arith.constant 0 : index
    %c0_1 = arith.constant 0 : index
    %0 = vector.load %arg2[%c0, %c0_0, %c0_1] : memref<1x8x16xf32, #tpu.memory_space<vmem>>, vector<1x8x16xf32>
    %1 = vector.shape_cast %0 : vector<1x8x16xf32> to vector<8x16xf32>
    %c0_2 = arith.constant 0 : index
    %c0_3 = arith.constant 0 : index
    %c0_4 = arith.constant 0 : index
    %2 = vector.load %arg3[%c0_2, %c0_3, %c0_4] : memref<1x16x1xf32, #tpu.memory_space<vmem>>, vector<1x16x1xf32>
    %3 = vector.shape_cast %2 : vector<1x16x1xf32> to vector<16x1xf32>
    %c0_5 = arith.constant 0 : index
    %c0_6 = arith.constant 0 : index
    %4 = memref.load %arg1[%c0_5, %c0_6] : memref<1x1xf32, #tpu.memory_space<smem>>
    %cst = arith.constant dense<0.000000e+00> : vector<8x8xf32>
    %5 = tpu.matmul %1, %1, %cst {dimension_numbers = #tpu.dot_dimension_numbers<[1], [1], [0], [0], [0, 0, 1, 0], [], []>} : vector<8x16xf32>, vector<8x16xf32>, vector<8x8xf32> -> vector<8x8xf32>
    %6 = tpu.iota {dimensions = array<i32: 0>} : vector<8x8xi32>
    %7 = tpu.iota {dimensions = array<i32: 1>} : vector<8x8xi32>
    %8 = arith.cmpi eq, %6, %7 : vector<8x8xi32>
    %9 = vector.broadcast %4 : f32 to vector<8x8xf32>
    %10 = arith.addf %5, %9 : vector<8x8xf32>
    %11 = arith.select %8, %10, %5 : vector<8x8xi1>, vector<8x8xf32>
    %cst_7 = arith.constant dense<0.000000e+00> : vector<1x8xf32>
    %12 = tpu.matmul %3, %1, %cst_7 {dimension_numbers = #tpu.dot_dimension_numbers<[0], [1], [1], [0], [0, 1, 1, 0], [], []>} : vector<16x1xf32>, vector<8x16xf32>, vector<1x8xf32> -> vector<1x8xf32>
    %13 = tpu.iota {dimensions = array<i32: 1>} : vector<1x8xi32>
    %14 = vector.extract_strided_slice %11 {offsets = [0, 0], sizes = [1, 1], strides = [1, 1]} : vector<8x8xf32> to vector<1x1xf32>
    %15 = tpu.reciprocal %14 {approx = true} : vector<1x1xf32> -> vector<1x1xf32>
    %16 = arith.mulf %14, %15 : vector<1x1xf32>
    %cst_8 = arith.constant 2.000000e+00 : f32
    %17 = vector.broadcast %cst_8 : f32 to vector<1x1xf32>
    %18 = arith.subf %17, %16 : vector<1x1xf32>
    %19 = arith.mulf %15, %18 : vector<1x1xf32>
    %20 = vector.extract_strided_slice %11 {offsets = [0, 0], sizes = [8, 1], strides = [1, 1]} : vector<8x8xf32> to vector<8x1xf32>
    %21 = vector.broadcast %19 : vector<1x1xf32> to vector<8x1xf32>
    %22 = arith.mulf %20, %21 : vector<8x1xf32>
    %c0_i32 = arith.constant 0 : i32
    %23 = vector.broadcast %c0_i32 : i32 to vector<1x8xi32>
    %24 = arith.cmpi eq, %13, %23 : vector<1x8xi32>
    %cst_9 = arith.constant 1.000000e+00 : f32
    %25 = vector.broadcast %cst_9 : f32 to vector<1x1xf32>
    %26 = arith.subf %14, %25 : vector<1x1xf32>
    %27 = vector.extract_strided_slice %11 {offsets = [0, 0], sizes = [1, 8], strides = [1, 1]} : vector<8x8xf32> to vector<1x8xf32>
    %28 = vector.shape_cast %26 : vector<1x1xf32> to vector<1x1xf32>
    %29 = vector.broadcast %28 : vector<1x1xf32> to vector<1x8xf32>
    %30 = arith.select %24, %29, %27 : vector<1x8xi1>, vector<1x8xf32>
    %31 = vector.extract_strided_slice %12 {offsets = [0, 0], sizes = [1, 1], strides = [1, 1]} : vector<1x8xf32> to vector<1x1xf32>
    %32 = vector.broadcast %22 : vector<8x1xf32> to vector<8x8xf32>
    %33 = vector.broadcast %30 : vector<1x8xf32> to vector<8x8xf32>
    %34 = arith.mulf %32, %33 : vector<8x8xf32>
    %35 = arith.subf %11, %34 : vector<8x8xf32>
    %36 = arith.mulf %31, %19 : vector<1x1xf32>
    %37 = vector.broadcast %36 : vector<1x1xf32> to vector<1x8xf32>
    %38 = arith.mulf %37, %30 : vector<1x8xf32>
    %39 = arith.subf %12, %38 : vector<1x8xf32>
    %40 = vector.extract_strided_slice %35 {offsets = [1, 1], sizes = [1, 1], strides = [1, 1]} : vector<8x8xf32> to vector<1x1xf32>
    %41 = tpu.reciprocal %40 {approx = true} : vector<1x1xf32> -> vector<1x1xf32>
    %42 = arith.mulf %40, %41 : vector<1x1xf32>
    %cst_10 = arith.constant 2.000000e+00 : f32
    %43 = vector.broadcast %cst_10 : f32 to vector<1x1xf32>
    %44 = arith.subf %43, %42 : vector<1x1xf32>
    %45 = arith.mulf %41, %44 : vector<1x1xf32>
    %46 = vector.extract_strided_slice %35 {offsets = [0, 1], sizes = [8, 1], strides = [1, 1]} : vector<8x8xf32> to vector<8x1xf32>
    %47 = vector.broadcast %45 : vector<1x1xf32> to vector<8x1xf32>
    %48 = arith.mulf %46, %47 : vector<8x1xf32>
    %c1_i32 = arith.constant 1 : i32
    %49 = vector.broadcast %c1_i32 : i32 to vector<1x8xi32>
    %50 = arith.cmpi eq, %13, %49 : vector<1x8xi32>
    %cst_11 = arith.constant 1.000000e+00 : f32
    %51 = vector.broadcast %cst_11 : f32 to vector<1x1xf32>
    %52 = arith.subf %40, %51 : vector<1x1xf32>
    %53 = vector.extract_strided_slice %35 {offsets = [1, 0], sizes = [1, 8], strides = [1, 1]} : vector<8x8xf32> to vector<1x8xf32>
    %54 = vector.shape_cast %52 : vector<1x1xf32> to vector<1x1xf32>
    %55 = vector.broadcast %54 : vector<1x1xf32> to vector<1x8xf32>
    %56 = arith.select %50, %55, %53 : vector<1x8xi1>, vector<1x8xf32>
    %57 = vector.extract_strided_slice %39 {offsets = [0, 1], sizes = [1, 1], strides = [1, 1]} : vector<1x8xf32> to vector<1x1xf32>
    %58 = vector.broadcast %48 : vector<8x1xf32> to vector<8x8xf32>
    %59 = vector.broadcast %56 : vector<1x8xf32> to vector<8x8xf32>
    %60 = arith.mulf %58, %59 : vector<8x8xf32>
    %61 = arith.subf %35, %60 : vector<8x8xf32>
    %62 = arith.mulf %57, %45 : vector<1x1xf32>
    %63 = vector.broadcast %62 : vector<1x1xf32> to vector<1x8xf32>
    %64 = arith.mulf %63, %56 : vector<1x8xf32>
    %65 = arith.subf %39, %64 : vector<1x8xf32>
    %66 = vector.extract_strided_slice %61 {offsets = [2, 2], sizes = [1, 1], strides = [1, 1]} : vector<8x8xf32> to vector<1x1xf32>
    %67 = tpu.reciprocal %66 {approx = true} : vector<1x1xf32> -> vector<1x1xf32>
    %68 = arith.mulf %66, %67 : vector<1x1xf32>
    %cst_12 = arith.constant 2.000000e+00 : f32
    %69 = vector.broadcast %cst_12 : f32 to vector<1x1xf32>
    %70 = arith.subf %69, %68 : vector<1x1xf32>
    %71 = arith.mulf %67, %70 : vector<1x1xf32>
    %72 = vector.extract_strided_slice %61 {offsets = [0, 2], sizes = [8, 1], strides = [1, 1]} : vector<8x8xf32> to vector<8x1xf32>
    %73 = vector.broadcast %71 : vector<1x1xf32> to vector<8x1xf32>
    %74 = arith.mulf %72, %73 : vector<8x1xf32>
    %c2_i32 = arith.constant 2 : i32
    %75 = vector.broadcast %c2_i32 : i32 to vector<1x8xi32>
    %76 = arith.cmpi eq, %13, %75 : vector<1x8xi32>
    %cst_13 = arith.constant 1.000000e+00 : f32
    %77 = vector.broadcast %cst_13 : f32 to vector<1x1xf32>
    %78 = arith.subf %66, %77 : vector<1x1xf32>
    %79 = vector.extract_strided_slice %61 {offsets = [2, 0], sizes = [1, 8], strides = [1, 1]} : vector<8x8xf32> to vector<1x8xf32>
    %80 = vector.shape_cast %78 : vector<1x1xf32> to vector<1x1xf32>
    %81 = vector.broadcast %80 : vector<1x1xf32> to vector<1x8xf32>
    %82 = arith.select %76, %81, %79 : vector<1x8xi1>, vector<1x8xf32>
    %83 = vector.extract_strided_slice %65 {offsets = [0, 2], sizes = [1, 1], strides = [1, 1]} : vector<1x8xf32> to vector<1x1xf32>
    %84 = vector.broadcast %74 : vector<8x1xf32> to vector<8x8xf32>
    %85 = vector.broadcast %82 : vector<1x8xf32> to vector<8x8xf32>
    %86 = arith.mulf %84, %85 : vector<8x8xf32>
    %87 = arith.subf %61, %86 : vector<8x8xf32>
    %88 = arith.mulf %83, %71 : vector<1x1xf32>
    %89 = vector.broadcast %88 : vector<1x1xf32> to vector<1x8xf32>
    %90 = arith.mulf %89, %82 : vector<1x8xf32>
    %91 = arith.subf %65, %90 : vector<1x8xf32>
    %92 = vector.extract_strided_slice %87 {offsets = [3, 3], sizes = [1, 1], strides = [1, 1]} : vector<8x8xf32> to vector<1x1xf32>
    %93 = tpu.reciprocal %92 {approx = true} : vector<1x1xf32> -> vector<1x1xf32>
    %94 = arith.mulf %92, %93 : vector<1x1xf32>
    %cst_14 = arith.constant 2.000000e+00 : f32
    %95 = vector.broadcast %cst_14 : f32 to vector<1x1xf32>
    %96 = arith.subf %95, %94 : vector<1x1xf32>
    %97 = arith.mulf %93, %96 : vector<1x1xf32>
    %98 = vector.extract_strided_slice %87 {offsets = [0, 3], sizes = [8, 1], strides = [1, 1]} : vector<8x8xf32> to vector<8x1xf32>
    %99 = vector.broadcast %97 : vector<1x1xf32> to vector<8x1xf32>
    %100 = arith.mulf %98, %99 : vector<8x1xf32>
    %c3_i32 = arith.constant 3 : i32
    %101 = vector.broadcast %c3_i32 : i32 to vector<1x8xi32>
    %102 = arith.cmpi eq, %13, %101 : vector<1x8xi32>
    %cst_15 = arith.constant 1.000000e+00 : f32
    %103 = vector.broadcast %cst_15 : f32 to vector<1x1xf32>
    %104 = arith.subf %92, %103 : vector<1x1xf32>
    %105 = vector.extract_strided_slice %87 {offsets = [3, 0], sizes = [1, 8], strides = [1, 1]} : vector<8x8xf32> to vector<1x8xf32>
    %106 = vector.shape_cast %104 : vector<1x1xf32> to vector<1x1xf32>
    %107 = vector.broadcast %106 : vector<1x1xf32> to vector<1x8xf32>
    %108 = arith.select %102, %107, %105 : vector<1x8xi1>, vector<1x8xf32>
    %109 = vector.extract_strided_slice %91 {offsets = [0, 3], sizes = [1, 1], strides = [1, 1]} : vector<1x8xf32> to vector<1x1xf32>
    %110 = vector.broadcast %100 : vector<8x1xf32> to vector<8x8xf32>
    %111 = vector.broadcast %108 : vector<1x8xf32> to vector<8x8xf32>
    %112 = arith.mulf %110, %111 : vector<8x8xf32>
    %113 = arith.subf %87, %112 : vector<8x8xf32>
    %114 = arith.mulf %109, %97 : vector<1x1xf32>
    %115 = vector.broadcast %114 : vector<1x1xf32> to vector<1x8xf32>
    %116 = arith.mulf %115, %108 : vector<1x8xf32>
    %117 = arith.subf %91, %116 : vector<1x8xf32>
    %118 = vector.extract_strided_slice %113 {offsets = [4, 4], sizes = [1, 1], strides = [1, 1]} : vector<8x8xf32> to vector<1x1xf32>
    %119 = tpu.reciprocal %118 {approx = true} : vector<1x1xf32> -> vector<1x1xf32>
    %120 = arith.mulf %118, %119 : vector<1x1xf32>
    %cst_16 = arith.constant 2.000000e+00 : f32
    %121 = vector.broadcast %cst_16 : f32 to vector<1x1xf32>
    %122 = arith.subf %121, %120 : vector<1x1xf32>
    %123 = arith.mulf %119, %122 : vector<1x1xf32>
    %124 = vector.extract_strided_slice %113 {offsets = [0, 4], sizes = [8, 1], strides = [1, 1]} : vector<8x8xf32> to vector<8x1xf32>
    %125 = vector.broadcast %123 : vector<1x1xf32> to vector<8x1xf32>
    %126 = arith.mulf %124, %125 : vector<8x1xf32>
    %c4_i32 = arith.constant 4 : i32
    %127 = vector.broadcast %c4_i32 : i32 to vector<1x8xi32>
    %128 = arith.cmpi eq, %13, %127 : vector<1x8xi32>
    %cst_17 = arith.constant 1.000000e+00 : f32
    %129 = vector.broadcast %cst_17 : f32 to vector<1x1xf32>
    %130 = arith.subf %118, %129 : vector<1x1xf32>
    %131 = vector.extract_strided_slice %113 {offsets = [4, 0], sizes = [1, 8], strides = [1, 1]} : vector<8x8xf32> to vector<1x8xf32>
    %132 = vector.shape_cast %130 : vector<1x1xf32> to vector<1x1xf32>
    %133 = vector.broadcast %132 : vector<1x1xf32> to vector<1x8xf32>
    %134 = arith.select %128, %133, %131 : vector<1x8xi1>, vector<1x8xf32>
    %135 = vector.extract_strided_slice %117 {offsets = [0, 4], sizes = [1, 1], strides = [1, 1]} : vector<1x8xf32> to vector<1x1xf32>
    %136 = vector.broadcast %126 : vector<8x1xf32> to vector<8x8xf32>
    %137 = vector.broadcast %134 : vector<1x8xf32> to vector<8x8xf32>
    %138 = arith.mulf %136, %137 : vector<8x8xf32>
    %139 = arith.subf %113, %138 : vector<8x8xf32>
    %140 = arith.mulf %135, %123 : vector<1x1xf32>
    %141 = vector.broadcast %140 : vector<1x1xf32> to vector<1x8xf32>
    %142 = arith.mulf %141, %134 : vector<1x8xf32>
    %143 = arith.subf %117, %142 : vector<1x8xf32>
    %144 = vector.extract_strided_slice %139 {offsets = [5, 5], sizes = [1, 1], strides = [1, 1]} : vector<8x8xf32> to vector<1x1xf32>
    %145 = tpu.reciprocal %144 {approx = true} : vector<1x1xf32> -> vector<1x1xf32>
    %146 = arith.mulf %144, %145 : vector<1x1xf32>
    %cst_18 = arith.constant 2.000000e+00 : f32
    %147 = vector.broadcast %cst_18 : f32 to vector<1x1xf32>
    %148 = arith.subf %147, %146 : vector<1x1xf32>
    %149 = arith.mulf %145, %148 : vector<1x1xf32>
    %150 = vector.extract_strided_slice %139 {offsets = [0, 5], sizes = [8, 1], strides = [1, 1]} : vector<8x8xf32> to vector<8x1xf32>
    %151 = vector.broadcast %149 : vector<1x1xf32> to vector<8x1xf32>
    %152 = arith.mulf %150, %151 : vector<8x1xf32>
    %c5_i32 = arith.constant 5 : i32
    %153 = vector.broadcast %c5_i32 : i32 to vector<1x8xi32>
    %154 = arith.cmpi eq, %13, %153 : vector<1x8xi32>
    %cst_19 = arith.constant 1.000000e+00 : f32
    %155 = vector.broadcast %cst_19 : f32 to vector<1x1xf32>
    %156 = arith.subf %144, %155 : vector<1x1xf32>
    %157 = vector.extract_strided_slice %139 {offsets = [5, 0], sizes = [1, 8], strides = [1, 1]} : vector<8x8xf32> to vector<1x8xf32>
    %158 = vector.shape_cast %156 : vector<1x1xf32> to vector<1x1xf32>
    %159 = vector.broadcast %158 : vector<1x1xf32> to vector<1x8xf32>
    %160 = arith.select %154, %159, %157 : vector<1x8xi1>, vector<1x8xf32>
    %161 = vector.extract_strided_slice %143 {offsets = [0, 5], sizes = [1, 1], strides = [1, 1]} : vector<1x8xf32> to vector<1x1xf32>
    %162 = vector.broadcast %152 : vector<8x1xf32> to vector<8x8xf32>
    %163 = vector.broadcast %160 : vector<1x8xf32> to vector<8x8xf32>
    %164 = arith.mulf %162, %163 : vector<8x8xf32>
    %165 = arith.subf %139, %164 : vector<8x8xf32>
    %166 = arith.mulf %161, %149 : vector<1x1xf32>
    %167 = vector.broadcast %166 : vector<1x1xf32> to vector<1x8xf32>
    %168 = arith.mulf %167, %160 : vector<1x8xf32>
    %169 = arith.subf %143, %168 : vector<1x8xf32>
    %170 = vector.extract_strided_slice %165 {offsets = [6, 6], sizes = [1, 1], strides = [1, 1]} : vector<8x8xf32> to vector<1x1xf32>
    %171 = tpu.reciprocal %170 {approx = true} : vector<1x1xf32> -> vector<1x1xf32>
    %172 = arith.mulf %170, %171 : vector<1x1xf32>
    %cst_20 = arith.constant 2.000000e+00 : f32
    %173 = vector.broadcast %cst_20 : f32 to vector<1x1xf32>
    %174 = arith.subf %173, %172 : vector<1x1xf32>
    %175 = arith.mulf %171, %174 : vector<1x1xf32>
    %176 = vector.extract_strided_slice %165 {offsets = [0, 6], sizes = [8, 1], strides = [1, 1]} : vector<8x8xf32> to vector<8x1xf32>
    %177 = vector.broadcast %175 : vector<1x1xf32> to vector<8x1xf32>
    %178 = arith.mulf %176, %177 : vector<8x1xf32>
    %c6_i32 = arith.constant 6 : i32
    %179 = vector.broadcast %c6_i32 : i32 to vector<1x8xi32>
    %180 = arith.cmpi eq, %13, %179 : vector<1x8xi32>
    %cst_21 = arith.constant 1.000000e+00 : f32
    %181 = vector.broadcast %cst_21 : f32 to vector<1x1xf32>
    %182 = arith.subf %170, %181 : vector<1x1xf32>
    %183 = vector.extract_strided_slice %165 {offsets = [6, 0], sizes = [1, 8], strides = [1, 1]} : vector<8x8xf32> to vector<1x8xf32>
    %184 = vector.shape_cast %182 : vector<1x1xf32> to vector<1x1xf32>
    %185 = vector.broadcast %184 : vector<1x1xf32> to vector<1x8xf32>
    %186 = arith.select %180, %185, %183 : vector<1x8xi1>, vector<1x8xf32>
    %187 = vector.extract_strided_slice %169 {offsets = [0, 6], sizes = [1, 1], strides = [1, 1]} : vector<1x8xf32> to vector<1x1xf32>
    %188 = vector.broadcast %178 : vector<8x1xf32> to vector<8x8xf32>
    %189 = vector.broadcast %186 : vector<1x8xf32> to vector<8x8xf32>
    %190 = arith.mulf %188, %189 : vector<8x8xf32>
    %191 = arith.subf %165, %190 : vector<8x8xf32>
    %192 = arith.mulf %187, %175 : vector<1x1xf32>
    %193 = vector.broadcast %192 : vector<1x1xf32> to vector<1x8xf32>
    %194 = arith.mulf %193, %186 : vector<1x8xf32>
    %195 = arith.subf %169, %194 : vector<1x8xf32>
    %196 = vector.extract_strided_slice %191 {offsets = [7, 7], sizes = [1, 1], strides = [1, 1]} : vector<8x8xf32> to vector<1x1xf32>
    %197 = tpu.reciprocal %196 {approx = true} : vector<1x1xf32> -> vector<1x1xf32>
    %198 = arith.mulf %196, %197 : vector<1x1xf32>
    %cst_22 = arith.constant 2.000000e+00 : f32
    %199 = vector.broadcast %cst_22 : f32 to vector<1x1xf32>
    %200 = arith.subf %199, %198 : vector<1x1xf32>
    %201 = arith.mulf %197, %200 : vector<1x1xf32>
    %c7_i32 = arith.constant 7 : i32
    %202 = vector.broadcast %c7_i32 : i32 to vector<1x8xi32>
    %203 = arith.cmpi eq, %13, %202 : vector<1x8xi32>
    %cst_23 = arith.constant 1.000000e+00 : f32
    %204 = vector.broadcast %cst_23 : f32 to vector<1x1xf32>
    %205 = arith.subf %196, %204 : vector<1x1xf32>
    %206 = vector.extract_strided_slice %191 {offsets = [7, 0], sizes = [1, 8], strides = [1, 1]} : vector<8x8xf32> to vector<1x8xf32>
    %207 = vector.shape_cast %205 : vector<1x1xf32> to vector<1x1xf32>
    %208 = vector.broadcast %207 : vector<1x1xf32> to vector<1x8xf32>
    %209 = arith.select %203, %208, %206 : vector<1x8xi1>, vector<1x8xf32>
    %210 = vector.extract_strided_slice %195 {offsets = [0, 7], sizes = [1, 1], strides = [1, 1]} : vector<1x8xf32> to vector<1x1xf32>
    %211 = arith.mulf %210, %201 : vector<1x1xf32>
    %212 = vector.broadcast %211 : vector<1x1xf32> to vector<1x8xf32>
    %213 = arith.mulf %212, %209 : vector<1x8xf32>
    %214 = arith.subf %195, %213 : vector<1x8xf32>
    %c0_24 = arith.constant 0 : index
    %c0_25 = arith.constant 0 : index
    %c0_26 = arith.constant 0 : index
    %215 = vector.load %arg4[%c0_24, %c0_25, %c0_26] : memref<1x1x8xf32, #tpu.memory_space<vmem>>, vector<1x1x8xf32>
    %216 = vector.shape_cast %215 : vector<1x1x8xf32> to vector<1x8xf32>
    %217 = vector.shape_cast %214 : vector<1x8xf32> to vector<1x1x8xf32>
    tpu.vector_store %arg4[%c0_24, %c0_25, %c0_26], %217 {strides = array<i32>} : memref<1x1x8xf32, #tpu.memory_space<vmem>>, vector<1x1x8xf32>,
    return
  }
  func.func @transform_0(%arg0: i32) -> (i32, i32) {
    %c0_i32 = arith.constant 0 : i32
    %c0_i32_0 = arith.constant 0 : i32
    %c0_i32_1 = arith.constant 0 : i32
    return %c0_i32, %c0_i32_0 : i32, i32
  }
  func.func @transform_1(%arg0: i32) -> (i32, i32, i32) {
    %c0_i32 = arith.constant 0 : i32
    %c0_i32_0 = arith.constant 0 : i32
    %c0_i32_1 = arith.constant 0 : i32
    return %arg0, %c0_i32, %c0_i32_0 : i32, i32, i32
  }
  func.func @transform_2(%arg0: i32) -> (i32, i32, i32) {
    %c0_i32 = arith.constant 0 : i32
    %c0_i32_0 = arith.constant 0 : i32
    %c0_i32_1 = arith.constant 0 : i32
    return %arg0, %c0_i32, %c0_i32_0 : i32, i32, i32
  }
  func.func @transform_3(%arg0: i32) -> (i32, i32, i32) {
    %c0_i32 = arith.constant 0 : i32
    %c0_i32_0 = arith.constant 0 : i32
    %c0_i32_1 = arith.constant 0 : i32
    return %arg0, %c0_i32, %c0_i32_0 : i32, i32, i32
  }
}

</mosaic_0001>

<llo_original>
// kernel: tpu_custom_call.1
$region0: #{tpu_custom_call.1}
  #allocation0 [shape = 'u32[]', space=smem, size = 0x4, offset = 0x4, fixed_abs, tag = 'smem constant byte address 0x4 - core index']
  #allocation1 [shape = 'u32[144,128]{1,0:T(1,128)}', space=vmem, size = 0x12000, scoped, tag = 'internal scratch']
  #allocation2 [shape = 'f32[1,1]{1,0:T(1,128)S(6)}', space=smem, size = 0x200, scoped, tag = 'scoped memory for tpu_custom_call.1']
  %s0 = inlined_call_operand.<no memory space> [shape: f32[1,1], index: 0, kind: input, shape index: {}]
  %s1 = inlined_call_operand.vmem [shape: f32[1,8,16], index: 1, kind: input, shape index: {}]
  %s2 = inlined_call_operand.vmem [shape: f32[1,16,1], index: 2, kind: input, shape index: {}]
  %s3 = inlined_call_operand.hbm [shape: f32[1,1,8], index: 3, kind: output, shape index: {}]
  %s4 = sld [smem:[#allocation0]]
  $region22: #{tpu_custom_call.1} parent=0
    _
  %s6 = ssub.s32 1, %s4
  %s7 = scalar_select 0, %s6, %s4
  %8 = sst [smem:[#allocation2]] %s0
  $region1: #{tpu_custom_call.1} parent=0
    #allocation3 [shape = 'u8[512]{0}', space=vmem, size = 0x400, scoped, tag = 'output window, operand 0, single buffered']
    #allocation4 [shape = 's32[1]{0}', space=sflag, size = 0x4, scoped, tag = 'scoped memory for tpu_custom_call.1']
    %9 = vsyncpa [#allocation4], 0
    // Predicated region
    $region2: #{tpu_custom_call.1} parent=1 // pred_check
      _
    $region3: #{tpu_custom_call.1} parent=1 // pred_check_branch
      %11 = sbr.rel (0) target = $region5
    $region4: #{tpu_custom_call.1} parent=1 // pred_region
      _
    $region5: #{tpu_custom_call.1} parent=1 // pred_fallthru
      _
    // Predicated region
    $region6: #{tpu_custom_call.1} parent=1 // pred_check
      _
    $region7: #{tpu_custom_call.1} parent=1 // pred_check_branch
      %13 = sbr.rel (0) target = $region9
    $region8: #{tpu_custom_call.1} parent=1 // pred_region
      _
    $region9: #{tpu_custom_call.1} parent=1 // pred_fallthru
      _
    // Predicated region
    $region10: #{tpu_custom_call.1} parent=1 // pred_check
      _
    $region11: #{tpu_custom_call.1} parent=1 // pred_check_branch
      %15 = sbr.rel (0) target = $region13
    $region12: #{tpu_custom_call.1} parent=1 // pred_region
      _
    $region13: #{tpu_custom_call.1} parent=1 // pred_fallthru
      _
    %v16 = vld [vmem:[%s1] sm:$0xff]
    %v17 = vld [vmem:[%s2] sm:$0xff]
    %v18 = vld [vmem:[%s2 + $0x8] sm:$0xff]
    %s19 = sld [smem:[#allocation2]]
    %vm20 = vcmask 130048
    %v22 = vsel %vm20, %v16, 0
    %24 = vmatprep.subr.mxu0 0.0
    %25 = vmatpush1.xpose.msra.mxu0 0.0
    %26 = vmatprep.subr.mxu0 0.0
    %27 = vmatpush1.xpose.msra.mxu0 0.0
    %28 = vmatprep.subr.mxu0 0.0
    %29 = vmatpush1.xpose.msra.mxu0 0.0
    %30 = vmatprep.subr.mxu0 0.0
    %31 = vmatpush1.xpose.msra.mxu0 0.0
    %32 = vmatprep.subr.mxu0 0.0
    %33 = vmatpush1.xpose.msra.mxu0 0.0
    %34 = vmatprep.subr.mxu0 0.0
    %35 = vmatpush1.xpose.msra.mxu0 0.0
    %36 = vmatprep.subr.mxu0 0.0
    %37 = vmatpush1.xpose.msra.mxu0 0.0
    %38 = vmatprep.subr.mxu0 0.0
    %39 = vmatpush1.xpose.msra.mxu0 0.0
    %40 = vmatprep.subr.mxu0 0.0
    %41 = vmatpush1.xpose.msra.mxu0 0.0
    %42 = vmatprep.subr.mxu0 0.0
    %43 = vmatpush1.xpose.msra.mxu0 0.0
    %44 = vmatprep.subr.mxu0 0.0
    %45 = vmatpush1.xpose.msra.mxu0 0.0
    %46 = vmatprep.subr.mxu0 0.0
    %47 = vmatpush1.xpose.msra.mxu0 0.0
    %48 = vmatprep.subr.mxu0 0.0
    %49 = vmatpush1.xpose.msra.mxu0 0.0
    %50 = vmatprep.subr.mxu0 0.0
    %51 = vmatpush1.xpose.msra.mxu0 0.0
    %52 = vmatprep.subr.mxu0 0.0
    %53 = vmatpush1.xpose.msra.mxu0 0.0
    %54 = vmatprep.subr.mxu0 0.0
    %55 = vmatpush1.xpose.msra.mxu0 %v22
    %56 = vmatprep.subr.mxu0 0.0
    %57 = vmatpush2.xpose.msra.mxu0 0.0
    %58 = vmatprep.subr.mxu0 0.0
    %59 = vmatpush2.xpose.msra.mxu0 0.0
    %60 = vmatprep.subr.mxu0 0.0
    %61 = vmatpush2.xpose.msra.mxu0 0.0
    %62 = vmatprep.subr.mxu0 0.0
    %63 = vmatpush2.xpose.msra.mxu0 0.0
    %64 = vmatprep.subr.mxu0 0.0
    %65 = vmatpush2.xpose.msra.mxu0 0.0
    %66 = vmatprep.subr.mxu0 0.0
    %67 = vmatpush2.xpose.msra.mxu0 0.0
    %68 = vmatprep.subr.mxu0 0.0
    %69 = vmatpush2.xpose.msra.mxu0 0.0
    %70 = vmatprep.subr.mxu0 0.0
    %71 = vmatpush2.xpose.msra.mxu0 0.0
    %72 = vmatprep.subr.mxu0 0.0
    %73 = vmatpush2.xpose.msra.mxu0 0.0
    %74 = vmatprep.subr.mxu0 0.0
    %75 = vmatpush2.xpose.msra.mxu0 0.0
    %76 = vmatprep.subr.mxu0 0.0
    %77 = vmatpush2.xpose.msra.mxu0 0.0
    %78 = vmatprep.subr.mxu0 0.0
    %79 = vmatpush2.xpose.msra.mxu0 0.0
    %80 = vmatprep.subr.mxu0 0.0
    %81 = vmatpush2.xpose.msra.mxu0 0.0
    %82 = vmatprep.subr.mxu0 0.0
    %83 = vmatpush2.xpose.msra.mxu0 0.0
    %84 = vmatprep.subr.mxu0 0.0
    %85 = vmatpush2.xpose.msra.mxu0 0.0
    %86 = vmatprep.subr.mxu0 0.0
    %87 = vmatpush2.xpose.msra.mxu0 0.0
    %88 = vmatprep.mubr.f32.mxu0 0.0
    %89 = vmatmul.mubr.f32.gmra.mxu0 %v22
    %v90 = vpop.f32.mrf.mxu0
    %v91 = vadd.f32 0.0, %v90
    %v92 = vpop.f32.mrf.mxu0
    %93 = vdwg.mxu0
    %v94 = vlaneseq
    %v95 = vshrl.u32 %v94, 7
    %v96 = vlaneseq
    %v97 = vand.u32 %v96, 127
    %vm98 = vcmp.eq.s32.totalorder %v95, %v97
    %v99 = vstv %s19
    %v100 = vadd.f32 %v91, %v99
    %v101 = vsel %vm98, %v100, %v91
    %102 = vxpose.xlu0.b32.start [1/16] %v17, 128
    %103 = vxpose.xlu0.b32.cont [2/16] %v18, 128
    %104 = vxpose.xlu0.b32.cont [3/16] 0.0, 128
    %105 = vxpose.xlu0.b32.cont [4/16] 0.0, 128
    %106 = vxpose.xlu0.b32.cont [5/16] 0.0, 128
    %107 = vxpose.xlu0.b32.cont [6/16] 0.0, 128
    %108 = vxpose.xlu0.b32.cont [7/16] 0.0, 128
    %109 = vxpose.xlu0.b32.cont [8/16] 0.0, 128
    %110 = vxpose.xlu0.b32.cont [9/16] 0.0, 128
    %111 = vxpose.xlu0.b32.cont [10/16] 0.0, 128
    %112 = vxpose.xlu0.b32.cont [11/16] 0.0, 128
    %113 = vxpose.xlu0.b32.cont [12/16] 0.0, 128
    %114 = vxpose.xlu0.b32.cont [13/16] 0.0, 128
    %115 = vxpose.xlu0.b32.cont [14/16] 0.0, 128
    %116 = vxpose.xlu0.b32.cont [15/16] 0.0, 128
    %117 = vxpose.xlu0.b32.end [16/16] 0.0, 128
    %v118 = vpop.trf.xlu0
    %v119 = vpop.trf.xlu0
    %v120 = vpop.trf.xlu0
    %v121 = vpop.trf.xlu0
    %v122 = vpop.trf.xlu0
    %v123 = vpop.trf.xlu0
    %v124 = vpop.trf.xlu0
    %v125 = vpop.trf.xlu0
    %v126 = vpop.trf.xlu0
    %v127 = vpop.trf.xlu0
    %v128 = vpop.trf.xlu0
    %v129 = vpop.trf.xlu0
    %v130 = vpop.trf.xlu0
    %v131 = vpop.trf.xlu0
    %v132 = vpop.trf.xlu0
    %v133 = vpop.trf.xlu0
    %v135 = vsel %vm20, %v118, 0
    %137 = vmatprep.subr.mxu0 0.0
    %138 = vmatpush1.xpose.msra.mxu0 0.0
    %139 = vmatprep.subr.mxu0 0.0
    %140 = vmatpush1.xpose.msra.mxu0 0.0
    %141 = vmatprep.subr.mxu0 0.0
    %142 = vmatpush1.xpose.msra.mxu0 0.0
    %143 = vmatprep.subr.mxu0 0.0
    %144 = vmatpush1.xpose.msra.mxu0 0.0
    %145 = vmatprep.subr.mxu0 0.0
    %146 = vmatpush1.xpose.msra.mxu0 0.0
    %147 = vmatprep.subr.mxu0 0.0
    %148 = vmatpush1.xpose.msra.mxu0 0.0
    %149 = vmatprep.subr.mxu0 0.0
    %150 = vmatpush1.xpose.msra.mxu0 0.0
    %151 = vmatprep.subr.mxu0 0.0
    %152 = vmatpush1.xpose.msra.mxu0 0.0
    %153 = vmatprep.subr.mxu0 0.0
    %154 = vmatpush1.xpose.msra.mxu0 0.0
    %155 = vmatprep.subr.mxu0 0.0
    %156 = vmatpush1.xpose.msra.mxu0 0.0
    %157 = vmatprep.subr.mxu0 0.0
    %158 = vmatpush1.xpose.msra.mxu0 0.0
    %159 = vmatprep.subr.mxu0 0.0
    %160 = vmatpush1.xpose.msra.mxu0 0.0
    %161 = vmatprep.subr.mxu0 0.0
    %162 = vmatpush1.xpose.msra.mxu0 0.0
    %163 = vmatprep.subr.mxu0 0.0
    %164 = vmatpush1.xpose.msra.mxu0 0.0
    %165 = vmatprep.subr.mxu0 0.0
    %166 = vmatpush1.xpose.msra.mxu0 0.0
    %167 = vmatprep.subr.mxu0 0.0
    %168 = vmatpush1.xpose.msra.mxu0 %v22
    %169 = vmatprep.subr.mxu0 0.0
    %170 = vmatpush2.xpose.msra.mxu0 0.0
    %171 = vmatprep.subr.mxu0 0.0
    %172 = vmatpush2.xpose.msra.mxu0 0.0
    %173 = vmatprep.subr.mxu0 0.0
    %174 = vmatpush2.xpose.msra.mxu0 0.0
    %175 = vmatprep.subr.mxu0 0.0
    %176 = vmatpush2.xpose.msra.mxu0 0.0
    %177 = vmatprep.subr.mxu0 0.0
    %178 = vmatpush2.xpose.msra.mxu0 0.0
    %179 = vmatprep.subr.mxu0 0.0
    %180 = vmatpush2.xpose.msra.mxu0 0.0
    %181 = vmatprep.subr.mxu0 0.0
    %182 = vmatpush2.xpose.msra.mxu0 0.0
    %183 = vmatprep.subr.mxu0 0.0
    %184 = vmatpush2.xpose.msra.mxu0 0.0
    %185 = vmatprep.subr.mxu0 0.0
    %186 = vmatpush2.xpose.msra.mxu0 0.0
    %187 = vmatprep.subr.mxu0 0.0
    %188 = vmatpush2.xpose.msra.mxu0 0.0
    %189 = vmatprep.subr.mxu0 0.0
    %190 = vmatpush2.xpose.msra.mxu0 0.0
    %191 = vmatprep.subr.mxu0 0.0
    %192 = vmatpush2.xpose.msra.mxu0 0.0
    %193 = vmatprep.subr.mxu0 0.0
    %194 = vmatpush2.xpose.msra.mxu0 0.0
    %195 = vmatprep.subr.mxu0 0.0
    %196 = vmatpush2.xpose.msra.mxu0 0.0
    %197 = vmatprep.subr.mxu0 0.0
    %198 = vmatpush2.xpose.msra.mxu0 0.0
    %199 = vmatprep.subr.mxu0 0.0
    %200 = vmatpush2.xpose.msra.mxu0 0.0
    %201 = vmatprep.mubr.f32.mxu0 0.0
    %202 = vmatmul.mubr.f32.gmra.mxu0 %v135
    %v203 = vpop.f32.mrf.mxu0
    %v204 = vadd.f32 0.0, %v203
    %v205 = vpop.f32.mrf.mxu0
    %206 = vdwg.mxu0
    %v207 = vrcp.pop %v101
    %v208 = vmul.f32 %v101, %v207
    %v209 = vsub.f32 2.0, %v208
    %v210 = vmul.f32 %v207, %v209
    %v211 = vlaneseq
    %v212 = vshrl.u32 %v211, 7
    %v213 = vsub.s32 0, %v212
    %v214 = vrot.slane %v210, %v213
    %v215 = vmul.f32 %v101, %v214
    %vm216 = vcmp.eq.s32.totalorder %v97, 0
    %v217 = vsub.f32 %v101, 1.0
    %219 = vset.pattern.permute.xlu0 0
    %220 = vperm.xlu0 %219, %v217
    %v221 = vpop.permute.xlu0 %220
    %v223 = vsel %vm216, %v221, %v101
    %225 = vset.pattern.permute.xlu0 0
    %226 = vperm.xlu0 %225, %v215
    %v227 = vpop.permute.xlu0 %226
    %v229 = vlaneseq
    %v230 = vshrl.u32 %v229, 7
    %v231 = vsub.s32 0, %v230
    %v232 = vrot.slane %v223, %v231
    %v233 = vmul.f32 %v227, %v232
    %v234 = vsub.f32 %v101, %v233
    %v235 = vmul.f32 %v204, %v210
    %237 = vset.pattern.permute.xlu0 0
    %238 = vperm.xlu0 %237, %v235
    %v239 = vpop.permute.xlu0 %238
    %v241 = vmul.f32 %v239, %v223
    %v242 = vsub.f32 %v204, %v241
    %v243 = vrcp.pop %v234
    %v244 = vmul.f32 %v234, %v243
    %v245 = vsub.f32 2.0, %v244
    %v246 = vmul.f32 %v243, %v245
    %v247 = vlaneseq
    %v248 = vshrl.u32 %v247, 7
    %v249 = vsub.s32 1, %v248
    %v250 = vrot.slane %v246, %v249
    %v251 = vmul.f32 %v234, %v250
    %vm252 = vcmp.eq.s32.totalorder %v97, 1
    %v253 = vsub.f32 %v234, 1.0
    %255 = vset.pattern.permute.xlu0 1
    %256 = vperm.xlu0 %255, %v253
    %v257 = vpop.permute.xlu0 %256
    %v259 = vsel %vm252, %v257, %v234
    %261 = vset.pattern.permute.xlu0 1
    %262 = vperm.xlu0 %261, %v251
    %v263 = vpop.permute.xlu0 %262
    %v265 = vlaneseq
    %v266 = vshrl.u32 %v265, 7
    %v267 = vsub.s32 1, %v266
    %v268 = vrot.slane %v259, %v267
    %v269 = vmul.f32 %v263, %v268
    %v270 = vsub.f32 %v234, %v269
    %v272 = vrot.slane %v246, 1
    %v274 = vmul.f32 %v242, %v272
    %276 = vset.pattern.permute.xlu0 1
    %277 = vperm.xlu0 %276, %v274
    %v278 = vpop.permute.xlu0 %277
    %v281 = vrot.slane %v259, 1
    %v283 = vmul.f32 %v278, %v281
    %v284 = vsub.f32 %v242, %v283
    %v285 = vrcp.pop %v270
    %v286 = vmul.f32 %v270, %v285
    %v287 = vsub.f32 2.0, %v286
    %v288 = vmul.f32 %v285, %v287
    %v289 = vlaneseq
    %v290 = vshrl.u32 %v289, 7
    %v291 = vsub.s32 2, %v290
    %v292 = vrot.slane %v288, %v291
    %v293 = vmul.f32 %v270, %v292
    %vm294 = vcmp.eq.s32.totalorder %v97, 2
    %v295 = vsub.f32 %v270, 1.0
    %297 = vset.pattern.permute.xlu0 2
    %298 = vperm.xlu0 %297, %v295
    %v299 = vpop.permute.xlu0 %298
    %v301 = vsel %vm294, %v299, %v270
    %303 = vset.pattern.permute.xlu0 2
    %304 = vperm.xlu0 %303, %v293
    %v305 = vpop.permute.xlu0 %304
    %v307 = vlaneseq
    %v308 = vshrl.u32 %v307, 7
    %v309 = vsub.s32 2, %v308
    %v310 = vrot.slane %v301, %v309
    %v311 = vmul.f32 %v305, %v310
    %v312 = vsub.f32 %v270, %v311
    %v314 = vrot.slane %v288, 2
    %v316 = vmul.f32 %v284, %v314
    %318 = vset.pattern.permute.xlu0 2
    %319 = vperm.xlu0 %318, %v316
    %v320 = vpop.permute.xlu0 %319
    %v323 = vrot.slane %v301, 2
    %v325 = vmul.f32 %v320, %v323
    %v326 = vsub.f32 %v284, %v325
    %v327 = vrcp.pop %v312
    %v328 = vmul.f32 %v312, %v327
    %v329 = vsub.f32 2.0, %v328
    %v330 = vmul.f32 %v327, %v329
    %v331 = vlaneseq
    %v332 = vshrl.u32 %v331, 7
    %v333 = vsub.s32 3, %v332
    %v334 = vrot.slane %v330, %v333
    %v335 = vmul.f32 %v312, %v334
    %vm336 = vcmp.eq.s32.totalorder %v97, 3
    %v337 = vsub.f32 %v312, 1.0
    %339 = vset.pattern.permute.xlu0 3
    %340 = vperm.xlu0 %339, %v337
    %v341 = vpop.permute.xlu0 %340
    %v343 = vsel %vm336, %v341, %v312
    %345 = vset.pattern.permute.xlu0 3
    %346 = vperm.xlu0 %345, %v335
    %v347 = vpop.permute.xlu0 %346
    %v349 = vlaneseq
    %v350 = vshrl.u32 %v349, 7
    %v351 = vsub.s32 3, %v350
    %v352 = vrot.slane %v343, %v351
    %v353 = vmul.f32 %v347, %v352
    %v354 = vsub.f32 %v312, %v353
    %v356 = vrot.slane %v330, 3
    %v358 = vmul.f32 %v326, %v356
    %360 = vset.pattern.permute.xlu0 3
    %361 = vperm.xlu0 %360, %v358
    %v362 = vpop.permute.xlu0 %361
    %v365 = vrot.slane %v343, 3
    %v367 = vmul.f32 %v362, %v365
    %v368 = vsub.f32 %v326, %v367
    %v369 = vrcp.pop %v354
    %v370 = vmul.f32 %v354, %v369
    %v371 = vsub.f32 2.0, %v370
    %v372 = vmul.f32 %v369, %v371
    %v373 = vlaneseq
    %v374 = vshrl.u32 %v373, 7
    %v375 = vsub.s32 4, %v374
    %v376 = vrot.slane %v372, %v375
    %v377 = vmul.f32 %v354, %v376
    %vm378 = vcmp.eq.s32.totalorder %v97, 4
    %v379 = vsub.f32 %v354, 1.0
    %381 = vset.pattern.permute.xlu0 4
    %382 = vperm.xlu0 %381, %v379
    %v383 = vpop.permute.xlu0 %382
    %v385 = vsel %vm378, %v383, %v354
    %387 = vset.pattern.permute.xlu0 4
    %388 = vperm.xlu0 %387, %v377
    %v389 = vpop.permute.xlu0 %388
    %v391 = vlaneseq
    %v392 = vshrl.u32 %v391, 7
    %v393 = vsub.s32 4, %v392
    %v394 = vrot.slane %v385, %v393
    %v395 = vmul.f32 %v389, %v394
    %v396 = vsub.f32 %v354, %v395
    %v398 = vrot.slane %v372, 4
    %v400 = vmul.f32 %v368, %v398
    %402 = vset.pattern.permute.xlu0 4
    %403 = vperm.xlu0 %402, %v400
    %v404 = vpop.permute.xlu0 %403
    %v407 = vrot.slane %v385, 4
    %v409 = vmul.f32 %v404, %v407
    %v410 = vsub.f32 %v368, %v409
    %v411 = vrcp.pop %v396
    %v412 = vmul.f32 %v396, %v411
    %v413 = vsub.f32 2.0, %v412
    %v414 = vmul.f32 %v411, %v413
    %v415 = vlaneseq
    %v416 = vshrl.u32 %v415, 7
    %v417 = vsub.s32 5, %v416
    %v418 = vrot.slane %v414, %v417
    %v419 = vmul.f32 %v396, %v418
    %vm420 = vcmp.eq.s32.totalorder %v97, 5
    %v421 = vsub.f32 %v396, 1.0
    %423 = vset.pattern.permute.xlu0 5
    %424 = vperm.xlu0 %423, %v421
    %v425 = vpop.permute.xlu0 %424
    %v427 = vsel %vm420, %v425, %v396
    %429 = vset.pattern.permute.xlu0 5
    %430 = vperm.xlu0 %429, %v419
    %v431 = vpop.permute.xlu0 %430
    %v433 = vlaneseq
    %v434 = vshrl.u32 %v433, 7
    %v435 = vsub.s32 5, %v434
    %v436 = vrot.slane %v427, %v435
    %v437 = vmul.f32 %v431, %v436
    %v438 = vsub.f32 %v396, %v437
    %v440 = vrot.slane %v414, 5
    %v442 = vmul.f32 %v410, %v440
    %444 = vset.pattern.permute.xlu0 5
    %445 = vperm.xlu0 %444, %v442
    %v446 = vpop.permute.xlu0 %445
    %v449 = vrot.slane %v427, 5
    %v451 = vmul.f32 %v446, %v449
    %v452 = vsub.f32 %v410, %v451
    %v453 = vrcp.pop %v438
    %v454 = vmul.f32 %v438, %v453
    %v455 = vsub.f32 2.0, %v454
    %v456 = vmul.f32 %v453, %v455
    %v457 = vlaneseq
    %v458 = vshrl.u32 %v457, 7
    %v459 = vsub.s32 6, %v458
    %v460 = vrot.slane %v456, %v459
    %v461 = vmul.f32 %v438, %v460
    %vm462 = vcmp.eq.s32.totalorder %v97, 6
    %v463 = vsub.f32 %v438, 1.0
    %465 = vset.pattern.permute.xlu0 6
    %466 = vperm.xlu0 %465, %v463
    %v467 = vpop.permute.xlu0 %466
    %v469 = vsel %vm462, %v467, %v438
    %471 = vset.pattern.permute.xlu0 6
    %472 = vperm.xlu0 %471, %v461
    %v473 = vpop.permute.xlu0 %472
    %v475 = vlaneseq
    %v476 = vshrl.u32 %v475, 7
    %v477 = vsub.s32 6, %v476
    %v478 = vrot.slane %v469, %v477
    %v479 = vmul.f32 %v473, %v478
    %v480 = vsub.f32 %v438, %v479
    %v482 = vrot.slane %v456, 6
    %v484 = vmul.f32 %v452, %v482
    %486 = vset.pattern.permute.xlu0 6
    %487 = vperm.xlu0 %486, %v484
    %v488 = vpop.permute.xlu0 %487
    %v491 = vrot.slane %v469, 6
    %v493 = vmul.f32 %v488, %v491
    %v494 = vsub.f32 %v452, %v493
    %v495 = vrcp.pop %v480
    %v496 = vmul.f32 %v480, %v495
    %v497 = vsub.f32 2.0, %v496
    %v498 = vmul.f32 %v495, %v497
    %vm499 = vcmp.eq.s32.totalorder %v97, 7
    %v500 = vsub.f32 %v480, 1.0
    %502 = vset.pattern.permute.xlu0 7
    %503 = vperm.xlu0 %502, %v500
    %v504 = vpop.permute.xlu0 %503
    %v506 = vsel %vm499, %v504, %v480
    %v508 = vrot.slane %v498, 7
    %v510 = vmul.f32 %v494, %v508
    %512 = vset.pattern.permute.xlu0 7
    %513 = vperm.xlu0 %512, %v510
    %v514 = vpop.permute.xlu0 %513
    %v517 = vrot.slane %v506, 7
    %v519 = vmul.f32 %v514, %v517
    %v520 = vsub.f32 %v494, %v519
    %vm521 = vcmask 57344
    %522 = vst.msk [vmem:[#allocation3] sm:$0x1] %vm521, %v520
    // Predicated region
    $region14: #{tpu_custom_call.1} parent=1 // pred_check
      _
    $region15: #{tpu_custom_call.1} parent=1 // pred_check_branch
      %524 = sbr.rel (0) target = $region17
    $region16: #{tpu_custom_call.1} parent=1 // pred_region
      %s526 = ssub.s32 16, 16
      %527 = vsyncadd [#allocation4], %s526
      %s529 = sshll.u32 [#allocation3], 4
      %s530 = int_to_ptr.vmem [resolvable:$true] %s529
      %532 = dma.vmem_to_hbm [thread:$0]  %s530, 16, %s3, [#allocation4]
    $region17: #{tpu_custom_call.1} parent=1 // pred_fallthru
      _
    // Predicated region
    $region18: #{tpu_custom_call.1} parent=1 // pred_check
      _
    $region19: #{tpu_custom_call.1} parent=1 // pred_check_branch
      %534 = sbr.rel (0) target = $region21
    $region20: #{tpu_custom_call.1} parent=1 // pred_region
      %535 = dma.done [#allocation4], 16
    $region21: #{tpu_custom_call.1} parent=1 // pred_fallthru
      _
    %536 = vsyncpa [#allocation4], 1

</llo_original>
